<compile_context>
chip_gen: v7x
topology: tpu7x:2x2x1
jax: 0.10.0
libtpu: 0.0.40
codegen_flags: <defaults>
</compile_context>

<pallas_src>
import functools

import numpy as np

import jax
import jax.numpy as jnp
from jax.experimental import pallas as pl
from jax.experimental.pallas import tpu as pltpu


def _shortcut_kernel(x_ref, s_ref, o_ref, *, tb, pad):
    # x_ref: (TB, C_in,  H*W)      input block (whole images, lane-dense)
    # s_ref: (H*W, Ho*Wo)          constant 0/1 decimation matrix (resident)
    # o_ref: (TB, C_out, Ho*Wo)    output block, C_out = C_in + 2*pad
    s = s_ref[...]
    hwo = o_ref.shape[2]
    zeros = jnp.zeros((pad, hwo), o_ref.dtype) if pad > 0 else None  # hoisted

    for i in range(tb):                       # short, statically unrolled
        img = x_ref[i]                        # (C_in, H*W)
        # Fused H/W stride-2 decimation on the MXU (exact: 0/1 select).
        dec = jnp.dot(img, s, preferred_element_type=jnp.float32)
        dec = dec.astype(o_ref.dtype)         # (C_in, Ho*Wo)
        if pad > 0:
            out_img = jnp.concatenate([zeros, dec, zeros], axis=0)  # (C_out, Ho*Wo)
        else:
            out_img = dec
        o_ref[i] = out_img                    # one full store per image


def _make_selection_matrix(h, w, h_out, w_out, dtype):
    """S[h*W + w, (h//2)*Wo + (w//2)] = 1 for even h, even w; else 0."""
    rows = np.arange(h * w)
    hh, ww = rows // w, rows % w
    keep = (hh % 2 == 0) & (ww % 2 == 0)
    tgt = (hh // 2) * w_out + (ww // 2)
    s = np.zeros((h * w, h_out * w_out), dtype=np.float32)
    s[rows[keep], tgt[keep]] = 1.0
    return jnp.asarray(s, dtype=dtype)


def lambda_layer(x_nchw, planes, *, batch_tile=None):
    """Pallas equivalent of LambdaLayer(lambda x: F.pad(x[:, :, ::2, ::2],
    (0, 0, 0, 0, planes // 4, planes // 4), "constant", 0))  (NCHW in/out)."""
    n, c_in, h, w = x_nchw.shape
    pad = planes // 4
    c_out = c_in + 2 * pad
    # ceil-division matches PyTorch's x[:, :, ::2, ::2] for odd H/W too.
    h_out = (h + 1) // 2
    w_out = (w + 1) // 2
    hw, hwo = h * w, h_out * w_out

    if batch_tile is None:
        itemsize = jnp.dtype(x_nchw.dtype).itemsize
        per_image_bytes = max(1, c_in * hw * itemsize)
        batch_tile = (1 << 20) // per_image_bytes        # ~1 MiB input / step
    tb = int(max(1, min(batch_tile, 32, n)))             # cap unroll & VMEM
    grid = (pl.cdiv(n, tb),)

    # Metadata-only reshape (merge trailing contiguous dims of row-major NCHW).
    x_flat = x_nchw.reshape(n, c_in, hw)
    s = _make_selection_matrix(h, w, h_out, w_out, x_nchw.dtype)

    kernel = functools.partial(_shortcut_kernel, tb=tb, pad=pad)

    out_flat = pl.pallas_call(
        kernel,
        out_shape=jax.ShapeDtypeStruct((n, c_out, hwo), x_nchw.dtype),
        grid=grid,
        in_specs=[
            pl.BlockSpec((tb, c_in, hw), lambda b: (b, 0, 0)),
            # Same block every step -> stays resident in VMEM (no re-DMA).
            pl.BlockSpec((hw, hwo), lambda b: (0, 0)),
        ],
        out_specs=pl.BlockSpec((tb, c_out, hwo), lambda b: (b, 0, 0)),
        compiler_params=pltpu.CompilerParams(
            dimension_semantics=("parallel",),   # batch tiles shard across v7x's 2 TCs
        ),
    )(x_flat, s)

    # Metadata-only reshape back to NCHW output.
    return out_flat.reshape(n, c_out, h_out, w_out)
    # TODO(synk): LambdaLayer is generic; only the concrete option-A shortcut
    # lambda used in nonlocalnn.py is implemented here (float dtypes assumed).


if __name__ == "__main__":
    # Small deterministic example: N=2, C=4, H=W=16; planes=8 -> pad 2 per side.
    key = jax.random.PRNGKey(0)
    x = jax.random.normal(key, (2, 4, 16, 16), dtype=jnp.float32)
    planes = 8

    fn = jax.jit(lambda_layer, static_argnums=1)
    out = jax.block_until_ready(fn(x, planes))

    # Pure-JAX reference of the PyTorch lambda:
    #   F.pad(x[:, :, ::2, ::2], (0,0,0,0,planes//4,planes//4), "constant", 0)
    pad = planes // 4
    ref = jnp.pad(x[:, :, ::2, ::2], ((0, 0), (pad, pad), (0, 0), (0, 0)))

    assert out.shape == ref.shape, (out.shape, ref.shape)
    assert out.dtype == ref.dtype, (out.dtype, ref.dtype)
    assert jnp.allclose(out, ref), "mismatch vs reference"

    print("KERNEL_OK")
</pallas_src>

<mosaic_0001>
module attributes {stable_mosaic.version = 11 : i64} {
  func.func @_shortcut_kernel(%arg0: i32, %arg1: memref<2x4x256xf32, #tpu.memory_space<vmem>>, %arg2: memref<256x64xf32, #tpu.memory_space<vmem>>, %arg3: memref<2x8x64xf32, #tpu.memory_space<vmem>>) attributes {dimension_semantics = [#tpu.dimension_semantics<parallel>], iteration_bounds = array<i64: 1>, scalar_prefetch = 0 : i64, scratch_operands = 0 : i64, tpu.core_type = #tpu.core_type<tc>, window_params = [{transform_indices = @transform_0, window_bounds = array<i64: 2, 4, 256>}, {pipeline_mode = #tpu.pipeline_mode<synchronous>, transform_indices = @transform_1, window_bounds = array<i64: 256, 64>}, {transform_indices = @transform_2, window_bounds = array<i64: 2, 8, 64>}]} {
    %c0 = arith.constant 0 : index
    %c0_0 = arith.constant 0 : index
    %0 = vector.load %arg2[%c0, %c0_0] : memref<256x64xf32, #tpu.memory_space<vmem>>, vector<256x64xf32>
    %cst = arith.constant 0.000000e+00 : f32
    %1 = vector.broadcast %cst : f32 to vector<2x64xf32>
    %c0_1 = arith.constant 0 : index
    %c0_2 = arith.constant 0 : index
    %c0_3 = arith.constant 0 : index
    %2 = vector.load %arg1[%c0_1, %c0_2, %c0_3] : memref<2x4x256xf32, #tpu.memory_space<vmem>>, vector<1x4x256xf32>
    %3 = vector.shape_cast %2 : vector<1x4x256xf32> to vector<4x256xf32>
    %cst_4 = arith.constant dense<0.000000e+00> : vector<4x64xf32>
    %4 = tpu.matmul %3, %0, %cst_4 {dimension_numbers = #tpu.dot_dimension_numbers<[1], [0], [0], [1], [0, 0, 1, 1], [], []>} : vector<4x256xf32>, vector<256x64xf32>, vector<4x64xf32> -> vector<4x64xf32>
    %5 = tpu.concatenate %1, %4, %1 in 0 : vector<2x64xf32>, vector<4x64xf32>, vector<2x64xf32> -> vector<8x64xf32>
    %c0_5 = arith.constant 0 : index
    %c0_6 = arith.constant 0 : index
    %c0_7 = arith.constant 0 : index
    %6 = vector.load %arg3[%c0_5, %c0_6, %c0_7] : memref<2x8x64xf32, #tpu.memory_space<vmem>>, vector<1x8x64xf32>
    %7 = vector.shape_cast %6 : vector<1x8x64xf32> to vector<8x64xf32>
    %8 = vector.shape_cast %5 : vector<8x64xf32> to vector<1x8x64xf32>
    tpu.vector_store %arg3[%c0_5, %c0_6, %c0_7], %8 {strides = array<i32>} : memref<2x8x64xf32, #tpu.memory_space<vmem>>, vector<1x8x64xf32>,
    %c1 = arith.constant 1 : index
    %c0_8 = arith.constant 0 : index
    %c0_9 = arith.constant 0 : index
    %9 = vector.load %arg1[%c1, %c0_8, %c0_9] : memref<2x4x256xf32, #tpu.memory_space<vmem>>, vector<1x4x256xf32>
    %10 = vector.shape_cast %9 : vector<1x4x256xf32> to vector<4x256xf32>
    %cst_10 = arith.constant dense<0.000000e+00> : vector<4x64xf32>
    %11 = tpu.matmul %10, %0, %cst_10 {dimension_numbers = #tpu.dot_dimension_numbers<[1], [0], [0], [1], [0, 0, 1, 1], [], []>} : vector<4x256xf32>, vector<256x64xf32>, vector<4x64xf32> -> vector<4x64xf32>
    %12 = tpu.concatenate %1, %11, %1 in 0 : vector<2x64xf32>, vector<4x64xf32>, vector<2x64xf32> -> vector<8x64xf32>
    %c1_11 = arith.constant 1 : index
    %c0_12 = arith.constant 0 : index
    %c0_13 = arith.constant 0 : index
    %13 = vector.load %arg3[%c1_11, %c0_12, %c0_13] : memref<2x8x64xf32, #tpu.memory_space<vmem>>, vector<1x8x64xf32>
    %14 = vector.shape_cast %13 : vector<1x8x64xf32> to vector<8x64xf32>
    %15 = vector.shape_cast %12 : vector<8x64xf32> to vector<1x8x64xf32>
    tpu.vector_store %arg3[%c1_11, %c0_12, %c0_13], %15 {strides = array<i32>} : memref<2x8x64xf32, #tpu.memory_space<vmem>>, vector<1x8x64xf32>,
    return
  }
  func.func @transform_0(%arg0: i32) -> (i32, i32, i32) {
    %c0_i32 = arith.constant 0 : i32
    %c0_i32_0 = arith.constant 0 : i32
    %c0_i32_1 = arith.constant 0 : i32
    return %arg0, %c0_i32, %c0_i32_0 : i32, i32, i32
  }
  func.func @transform_1(%arg0: i32) -> (i32, i32) {
    %c0_i32 = arith.constant 0 : i32
    %c0_i32_0 = arith.constant 0 : i32
    %c0_i32_1 = arith.constant 0 : i32
    return %c0_i32, %c0_i32_0 : i32, i32
  }
  func.func @transform_2(%arg0: i32) -> (i32, i32, i32) {
    %c0_i32 = arith.constant 0 : i32
    %c0_i32_0 = arith.constant 0 : i32
    %c0_i32_1 = arith.constant 0 : i32
    return %arg0, %c0_i32, %c0_i32_0 : i32, i32, i32
  }
}

</mosaic_0001>

<llo_original>
// kernel: lambda_layer.1
$region0: #{lambda_layer.1}
  #allocation0 [shape = 'u32[]', space=smem, size = 0x4, offset = 0x4, fixed_abs, tag = 'smem constant byte address 0x4 - core index']
  #allocation1 [shape = 'u32[144,128]{1,0:T(1,128)}', space=vmem, size = 0x12000, scoped, tag = 'internal scratch']
  %s0 = inlined_call_operand.vmem [shape: f32[2,4,256], index: 0, kind: input, shape index: {}]
  %s1 = inlined_call_operand.hbm [shape: f32[256,64], index: 1, kind: input, shape index: {}]
  %s2 = inlined_call_operand.vmem [shape: f32[2,8,64], index: 2, kind: output, shape index: {}]
  %s3 = sld [smem:[#allocation0]]
  $region22: #{lambda_layer.1} parent=0
    _
  %s5 = ssub.s32 1, %s3
  %s6 = scalar_select 0, %s5, %s3
  $region1: #{lambda_layer.1} parent=0
    #allocation2 [shape = 'u8[131072]{0}', space=vmem, size = 0x20000, scoped, tag = 'input window, operand 1, single buffered']
    #allocation3 [shape = 's32[1]{0}', space=sflag, size = 0x4, scoped, tag = 'scoped memory for lambda_layer.1']
    %7 = vsyncpa [#allocation3], 0
    // Predicated region
    $region2: #{lambda_layer.1} parent=1 // pred_check
      _
    $region3: #{lambda_layer.1} parent=1 // pred_check_branch
      %9 = sbr.rel (0) target = $region5
    $region4: #{lambda_layer.1} parent=1 // pred_region
      _
    $region5: #{lambda_layer.1} parent=1 // pred_fallthru
      _
    // Predicated region
    $region6: #{lambda_layer.1} parent=1 // pred_check
      _
    $region7: #{lambda_layer.1} parent=1 // pred_check_branch
      %11 = sbr.rel (0) target = $region9
    $region8: #{lambda_layer.1} parent=1 // pred_region
      %s13 = ssub.s32 4096, 4096
      %14 = vsyncadd [#allocation3], %s13
      %s15 = sshll.u32 [#allocation2], 4
      %s16 = int_to_ptr.vmem [resolvable:$true] %s15
      %21 = dma.hbm_to_vmem [thread:$0]  %s1, 4096, %s16, [#allocation3], 128, 128, 8
    $region9: #{lambda_layer.1} parent=1 // pred_fallthru
      _
    // Predicated region
    $region10: #{lambda_layer.1} parent=1 // pred_check
      _
    $region11: #{lambda_layer.1} parent=1 // pred_check_branch
      %23 = sbr.rel (0) target = $region13
    $region12: #{lambda_layer.1} parent=1 // pred_region
      %24 = dma.done [#allocation3], 4096
    $region13: #{lambda_layer.1} parent=1 // pred_fallthru
      _
    %v25 = vld [vmem:[#allocation2] sm:$0xff]
    %v26 = vld [vmem:[#allocation2 + $0x8] sm:$0xff]
    %v27 = vld [vmem:[#allocation2 + $0x10] sm:$0xff]
    %v28 = vld [vmem:[#allocation2 + $0x18] sm:$0xff]
    %v29 = vld [vmem:[#allocation2 + $0x20] sm:$0xff]
    %v30 = vld [vmem:[#allocation2 + $0x28] sm:$0xff]
    %v31 = vld [vmem:[#allocation2 + $0x30] sm:$0xff]
    %v32 = vld [vmem:[#allocation2 + $0x38] sm:$0xff]
    %v33 = vld [vmem:[#allocation2 + $0x40] sm:$0xff]
    %v34 = vld [vmem:[#allocation2 + $0x48] sm:$0xff]
    %v35 = vld [vmem:[#allocation2 + $0x50] sm:$0xff]
    %v36 = vld [vmem:[#allocation2 + $0x58] sm:$0xff]
    %v37 = vld [vmem:[#allocation2 + $0x60] sm:$0xff]
    %v38 = vld [vmem:[#allocation2 + $0x68] sm:$0xff]
    %v39 = vld [vmem:[#allocation2 + $0x70] sm:$0xff]
    %v40 = vld [vmem:[#allocation2 + $0x78] sm:$0xff]
    %v41 = vld [vmem:[#allocation2 + $0x80] sm:$0xff]
    %v42 = vld [vmem:[#allocation2 + $0x88] sm:$0xff]
    %v43 = vld [vmem:[#allocation2 + $0x90] sm:$0xff]
    %v44 = vld [vmem:[#allocation2 + $0x98] sm:$0xff]
    %v45 = vld [vmem:[#allocation2 + $0xa0] sm:$0xff]
    %v46 = vld [vmem:[#allocation2 + $0xa8] sm:$0xff]
    %v47 = vld [vmem:[#allocation2 + $0xb0] sm:$0xff]
    %v48 = vld [vmem:[#allocation2 + $0xb8] sm:$0xff]
    %v49 = vld [vmem:[#allocation2 + $0xc0] sm:$0xff]
    %v50 = vld [vmem:[#allocation2 + $0xc8] sm:$0xff]
    %v51 = vld [vmem:[#allocation2 + $0xd0] sm:$0xff]
    %v52 = vld [vmem:[#allocation2 + $0xd8] sm:$0xff]
    %v53 = vld [vmem:[#allocation2 + $0xe0] sm:$0xff]
    %v54 = vld [vmem:[#allocation2 + $0xe8] sm:$0xff]
    %v55 = vld [vmem:[#allocation2 + $0xf0] sm:$0xff]
    %v56 = vld [vmem:[#allocation2 + $0xf8] sm:$0xff]
    %v57 = vld [vmem:[%s0] sm:$0xff]
    %v59 = vcombine.high %v57, %v57
    %61 = vmatprep.subr.mxu0 0.0
    %62 = vmatpush1.msra.mxu0 %v25
    %63 = vmatprep.subr.mxu0 0.0
    %64 = vmatpush1.msra.mxu0 %v26
    %65 = vmatprep.subr.mxu0 0.0
    %66 = vmatpush1.msra.mxu0 %v27
    %67 = vmatprep.subr.mxu0 0.0
    %68 = vmatpush1.msra.mxu0 %v28
    %69 = vmatprep.subr.mxu0 0.0
    %70 = vmatpush1.msra.mxu0 %v29
    %71 = vmatprep.subr.mxu0 0.0
    %72 = vmatpush1.msra.mxu0 %v30
    %73 = vmatprep.subr.mxu0 0.0
    %74 = vmatpush1.msra.mxu0 %v31
    %75 = vmatprep.subr.mxu0 0.0
    %76 = vmatpush1.msra.mxu0 %v32
    %77 = vmatprep.subr.mxu0 0.0
    %78 = vmatpush1.msra.mxu0 %v33
    %79 = vmatprep.subr.mxu0 0.0
    %80 = vmatpush1.msra.mxu0 %v34
    %81 = vmatprep.subr.mxu0 0.0
    %82 = vmatpush1.msra.mxu0 %v35
    %83 = vmatprep.subr.mxu0 0.0
    %84 = vmatpush1.msra.mxu0 %v36
    %85 = vmatprep.subr.mxu0 0.0
    %86 = vmatpush1.msra.mxu0 %v37
    %87 = vmatprep.subr.mxu0 0.0
    %88 = vmatpush1.msra.mxu0 %v38
    %89 = vmatprep.subr.mxu0 0.0
    %90 = vmatpush1.msra.mxu0 %v39
    %91 = vmatprep.subr.mxu0 0.0
    %92 = vmatpush1.msra.mxu0 %v40
    %93 = vmatprep.subr.mxu0 0.0
    %94 = vmatpush1.msra.mxu0 %v41
    %95 = vmatprep.subr.mxu0 0.0
    %96 = vmatpush1.msra.mxu0 %v42
    %97 = vmatprep.subr.mxu0 0.0
    %98 = vmatpush1.msra.mxu0 %v43
    %99 = vmatprep.subr.mxu0 0.0
    %100 = vmatpush1.msra.mxu0 %v44
    %101 = vmatprep.subr.mxu0 0.0
    %102 = vmatpush1.msra.mxu0 %v45
    %103 = vmatprep.subr.mxu0 0.0
    %104 = vmatpush1.msra.mxu0 %v46
    %105 = vmatprep.subr.mxu0 0.0
    %106 = vmatpush1.msra.mxu0 %v47
    %107 = vmatprep.subr.mxu0 0.0
    %108 = vmatpush1.msra.mxu0 %v48
    %109 = vmatprep.subr.mxu0 0.0
    %110 = vmatpush1.msra.mxu0 %v49
    %111 = vmatprep.subr.mxu0 0.0
    %112 = vmatpush1.msra.mxu0 %v50
    %113 = vmatprep.subr.mxu0 0.0
    %114 = vmatpush1.msra.mxu0 %v51
    %115 = vmatprep.subr.mxu0 0.0
    %116 = vmatpush1.msra.mxu0 %v52
    %117 = vmatprep.subr.mxu0 0.0
    %118 = vmatpush1.msra.mxu0 %v53
    %119 = vmatprep.subr.mxu0 0.0
    %120 = vmatpush1.msra.mxu0 %v54
    %121 = vmatprep.subr.mxu0 0.0
    %122 = vmatpush1.msra.mxu0 %v55
    %123 = vmatprep.subr.mxu0 0.0
    %124 = vmatpush1.msra.mxu0 %v56
    %125 = vmatprep.mubr.f32.mxu0 %v59
    %126 = vmatmul.mubr.f32.gmra.mrb[0].mxu0 %v57
    %v127 = vpop.f32.mrb[0].mxu0
    %v128 = vadd.f32 0.0, %v127
    %v129 = vpop.f32.mrb[0].mxu0
    %130 = vdwg.mxu0
    %v132 = vrot.slane %v128, 6
    %vm134 = vcmask 1041408
    %v135 = vsel %vm134, 0.0, %v132
    %vm136 = vcmask 1045504
    %v137 = vsel %vm136, %v135, 0.0
    %vm138 = vcmask 523264
    %139 = vst.msk [vmem:[%s2] sm:$0xff] %vm138, %v137
    %s140 = scalar_lea.vmem %s0, 8
    %v141 = vld [vmem:[%s140] sm:$0xff]
    %v143 = vcombine.high %v141, %v141
    %145 = vmatprep.subr.mxu0 0.0
    %146 = vmatpush1.msra.mxu0 %v25
    %147 = vmatprep.subr.mxu0 0.0
    %148 = vmatpush1.msra.mxu0 %v26
    %149 = vmatprep.subr.mxu0 0.0
    %150 = vmatpush1.msra.mxu0 %v27
    %151 = vmatprep.subr.mxu0 0.0
    %152 = vmatpush1.msra.mxu0 %v28
    %153 = vmatprep.subr.mxu0 0.0
    %154 = vmatpush1.msra.mxu0 %v29
    %155 = vmatprep.subr.mxu0 0.0
    %156 = vmatpush1.msra.mxu0 %v30
    %157 = vmatprep.subr.mxu0 0.0
    %158 = vmatpush1.msra.mxu0 %v31
    %159 = vmatprep.subr.mxu0 0.0
    %160 = vmatpush1.msra.mxu0 %v32
    %161 = vmatprep.subr.mxu0 0.0
    %162 = vmatpush1.msra.mxu0 %v33
    %163 = vmatprep.subr.mxu0 0.0
    %164 = vmatpush1.msra.mxu0 %v34
    %165 = vmatprep.subr.mxu0 0.0
    %166 = vmatpush1.msra.mxu0 %v35
    %167 = vmatprep.subr.mxu0 0.0
    %168 = vmatpush1.msra.mxu0 %v36
    %169 = vmatprep.subr.mxu0 0.0
    %170 = vmatpush1.msra.mxu0 %v37
    %171 = vmatprep.subr.mxu0 0.0
    %172 = vmatpush1.msra.mxu0 %v38
    %173 = vmatprep.subr.mxu0 0.0
    %174 = vmatpush1.msra.mxu0 %v39
    %175 = vmatprep.subr.mxu0 0.0
    %176 = vmatpush1.msra.mxu0 %v40
    %177 = vmatprep.subr.mxu0 0.0
    %178 = vmatpush1.msra.mxu0 %v41
    %179 = vmatprep.subr.mxu0 0.0
    %180 = vmatpush1.msra.mxu0 %v42
    %181 = vmatprep.subr.mxu0 0.0
    %182 = vmatpush1.msra.mxu0 %v43
    %183 = vmatprep.subr.mxu0 0.0
    %184 = vmatpush1.msra.mxu0 %v44
    %185 = vmatprep.subr.mxu0 0.0
    %186 = vmatpush1.msra.mxu0 %v45
    %187 = vmatprep.subr.mxu0 0.0
    %188 = vmatpush1.msra.mxu0 %v46
    %189 = vmatprep.subr.mxu0 0.0
    %190 = vmatpush1.msra.mxu0 %v47
    %191 = vmatprep.subr.mxu0 0.0
    %192 = vmatpush1.msra.mxu0 %v48
    %193 = vmatprep.subr.mxu0 0.0
    %194 = vmatpush1.msra.mxu0 %v49
    %195 = vmatprep.subr.mxu0 0.0
    %196 = vmatpush1.msra.mxu0 %v50
    %197 = vmatprep.subr.mxu0 0.0
    %198 = vmatpush1.msra.mxu0 %v51
    %199 = vmatprep.subr.mxu0 0.0
    %200 = vmatpush1.msra.mxu0 %v52
    %201 = vmatprep.subr.mxu0 0.0
    %202 = vmatpush1.msra.mxu0 %v53
    %203 = vmatprep.subr.mxu0 0.0
    %204 = vmatpush1.msra.mxu0 %v54
    %205 = vmatprep.subr.mxu0 0.0
    %206 = vmatpush1.msra.mxu0 %v55
    %207 = vmatprep.subr.mxu0 0.0
    %208 = vmatpush1.msra.mxu0 %v56
    %209 = vmatprep.mubr.f32.mxu0 %v143
    %210 = vmatmul.mubr.f32.gmra.mrb[0].mxu0 %v141
    %v211 = vpop.f32.mrb[0].mxu0
    %v212 = vadd.f32 0.0, %v211
    %v213 = vpop.f32.mrb[0].mxu0
    %214 = vdwg.mxu0
    %v216 = vrot.slane %v212, 6
    %v218 = vsel %vm134, 0.0, %v216
    %v219 = vsel %vm136, %v218, 0.0
    %s220 = scalar_lea.vmem %s2, 8
    %221 = vst.msk [vmem:[%s220] sm:$0xff] %vm138, %v219
    // Predicated region
    $region14: #{lambda_layer.1} parent=1 // pred_check
      _
    $region15: #{lambda_layer.1} parent=1 // pred_check_branch
      %223 = sbr.rel (0) target = $region17
    $region16: #{lambda_layer.1} parent=1 // pred_region
      _
    $region17: #{lambda_layer.1} parent=1 // pred_fallthru
      _
    // Predicated region
    $region18: #{lambda_layer.1} parent=1 // pred_check
      _
    $region19: #{lambda_layer.1} parent=1 // pred_check_branch
      %225 = sbr.rel (0) target = $region21
    $region20: #{lambda_layer.1} parent=1 // pred_region
      _
    $region21: #{lambda_layer.1} parent=1 // pred_fallthru
      _
    %226 = vsyncpa [#allocation3], 1

</llo_original>
